<compile_context>
chip_gen: v7x
topology: tpu7x:2x2x1
jax: 0.10.0
libtpu: 0.0.40
codegen_flags: <defaults>
</compile_context>

<pallas_src>
import functools

import jax
import jax.numpy as jnp
from jax.experimental import pallas as pl
from jax.experimental.pallas import tpu as pltpu


def _round_up(x, m):
    return ((x + m - 1) // m) * m


def _op_layer_kernel(x_ref, wcat_ref, wout_ref, b_ref, o_ref):
    # x_ref:    (tm, ary*e_dim)        bf16 activations (batch tile)
    # wcat_ref: (ary*e_dim, 2*e_dim)   bf16 fused [W_in | W_res]
    # wout_ref: (e_dim, e_dim)         bf16
    # b_ref:    (1, e_dim)             f32
    # o_ref:    (tm, e_dim)            f32
    e_dim = wout_ref.shape[0]

    # One fused (256-wide on v6e/v7x) MXU push computes both the relu branch
    # and the residual branch; accumulate in f32.
    h = jnp.dot(x_ref[...], wcat_ref[...], preferred_element_type=jnp.float32)
    l1 = jnp.maximum(h[:, :e_dim], 0.0)   # relu branch     (f32)
    res = h[:, e_dim:]                    # residual branch (f32)

    # Output layer; bias added in f32.
    outb = jnp.dot(
        l1.astype(wout_ref.dtype), wout_ref[...],
        preferred_element_type=jnp.float32,
    )
    lout = res + outb + b_ref[...]

    # F.normalize(p=2, dim=1): divide by max(||lout||_2, 1e-12).
    # rsqrt(max(sq, 1e-24)) == 1 / max(sqrt(sq), 1e-12)  (sqrt is monotone).
    sq = jnp.sum(lout * lout, axis=-1, keepdims=True)
    inv = jax.lax.rsqrt(jnp.maximum(sq, 1e-24))
    o_ref[...] = (lout * inv).astype(o_ref.dtype)


def prepare_params(w_in, w_res, w_out, b_out, weight_dtype=jnp.bfloat16):
    """One-time parameter prep (not per forward).

    Weights are stored as (in_features, out_features), i.e. nn.Linear W.T.
    Fuses W_in|W_res along the output dim and casts weights to `weight_dtype`
    (bf16 halves the dominant HBM->VMEM weight bytes; MXU accumulates in f32).
    """
    w_cat = jnp.concatenate([w_in, w_res], axis=1).astype(weight_dtype)
    w_out_q = jnp.asarray(w_out, dtype=weight_dtype)
    b2d = jnp.asarray(b_out, dtype=jnp.float32).reshape(1, -1)
    return w_cat, w_out_q, b2d


@functools.partial(jax.jit, static_argnames=("act_dtype",))
def op_layer_forward_batched(x, w_cat, w_out, b2d, *, act_dtype=jnp.bfloat16):
    """Batched opLayer: x is (B, ary*e_dim); returns (B, e_dim), L2-normalized rows."""
    B, in_dim = x.shape
    e_dim = w_out.shape[0]

    # Batch tile: multiple of 8 sublanes, capped at 256 (MXU height v6e/v7x).
    tm = 256 if B >= 256 else _round_up(B, 8)
    bp = _round_up(B, tm)

    xq = x.astype(act_dtype)
    if bp != B:
        xq = jnp.pad(xq, ((0, bp - B), (0, 0)))

    out = pl.pallas_call(
        _op_layer_kernel,
        out_shape=jax.ShapeDtypeStruct((bp, e_dim), jnp.float32),
        grid_spec=pltpu.PrefetchScalarGridSpec(
            num_scalar_prefetch=0,
            grid=(bp // tm,),
            in_specs=[
                # Activation tile advances along the batch grid (pipelined).
                pl.BlockSpec((tm, in_dim), lambda i: (i, 0)),
                # Weights: constant block index -> DMA'd once, VMEM-resident.
                pl.BlockSpec(w_cat.shape, lambda i: (0, 0)),
                pl.BlockSpec(w_out.shape, lambda i: (0, 0)),
                pl.BlockSpec(b2d.shape, lambda i: (0, 0)),
            ],
            out_specs=pl.BlockSpec((tm, e_dim), lambda i: (i, 0)),
        ),
        compiler_params=pltpu.CompilerParams(
            dimension_semantics=("parallel",),
            vmem_limit_bytes=32 * 1024 * 1024,
        ),
    )(xq, w_cat, w_out, b2d)
    return out[:B]


@jax.jit
def op_layer_forward(x_list, w_cat, w_out, b2d):
    """Module-equivalent forward: list of `ary` (e_dim,) vectors -> (1, e_dim)."""
    l0 = jnp.concatenate([jnp.ravel(xi) for xi in x_list]).reshape(1, -1)
    return op_layer_forward_batched(l0, w_cat, w_out, b2d)


# ----------------------------- references ---------------------------------


def _reference_f32(l0, w_in, w_res, w_out, b_out):
    """Exact f32 torch semantics."""
    hp = jax.lax.Precision.HIGHEST
    l1 = jax.nn.relu(jnp.dot(l0, w_in, precision=hp))
    lout = (jnp.dot(l0, w_res, precision=hp)
            + jnp.dot(l1, w_out, precision=hp) + b_out[None, :])
    n = jnp.maximum(jnp.linalg.norm(lout, axis=1, keepdims=True), 1e-12)
    return lout / n


def _reference_bf16(l0, w_cat, w_out_q, b2d):
    """Reference with the same bf16 quantization points as the kernel."""
    hp = jax.lax.Precision.HIGHEST
    e_dim = w_out_q.shape[0]
    l0q = l0.astype(jnp.bfloat16).astype(jnp.float32)
    wc = w_cat.astype(jnp.float32)
    wo = w_out_q.astype(jnp.float32)
    h = jnp.dot(l0q, wc, precision=hp)
    l1 = jnp.maximum(h[:, :e_dim], 0.0).astype(jnp.bfloat16).astype(jnp.float32)
    lout = h[:, e_dim:] + jnp.dot(l1, wo, precision=hp) + b2d
    n = jnp.maximum(jnp.linalg.norm(lout, axis=1, keepdims=True), 1e-12)
    return lout / n


if __name__ == "__main__":
    ary = 2
    e_dim = 128
    batch = 500  # deliberately not a multiple of the 256-row tile (exercises padding)

    key = jax.random.PRNGKey(0)
    k_x0, k_x1, k_xb, k_in, k_res, k_out, k_b = jax.random.split(key, 7)

    # Module inputs: `ary` vectors of length e_dim (single sample, as in torch).
    x_list = [
        jax.random.normal(k_x0, (e_dim,), dtype=jnp.float32),
        jax.random.normal(k_x1, (e_dim,), dtype=jnp.float32),
    ]
    # Batched activations: B independent applications of the same layer.
    x_batched = jax.random.normal(k_xb, (batch, ary * e_dim), dtype=jnp.float32)

    # Parameters stored as (in, out) == nn.Linear weight.T
    scale_big = 1.0 / jnp.sqrt(ary * e_dim)
    scale_sm = 1.0 / jnp.sqrt(e_dim)
    w_in = jax.random.uniform(
        k_in, (ary * e_dim, e_dim), jnp.float32, -scale_big, scale_big)
    w_res = jax.random.uniform(
        k_res, (ary * e_dim, e_dim), jnp.float32, -scale_big, scale_big)
    w_out = jax.random.uniform(
        k_out, (e_dim, e_dim), jnp.float32, -scale_sm, scale_sm)
    b_out = jax.random.uniform(k_b, (e_dim,), jnp.float32, -scale_sm, scale_sm)

    # One-time parameter prep: fuse W_in|W_res, cast weights to bf16.
    w_cat, w_out_q, b2d = prepare_params(w_in, w_res, w_out, b_out)

    # --- module-equivalent single-sample forward ---------------------------
    out1 = jax.block_until_ready(op_layer_forward(x_list, w_cat, w_out_q, b2d))
    l0 = jnp.concatenate(x_list).reshape(1, -1)
    ref1_q = _reference_bf16(l0, w_cat, w_out_q, b2d)
    ref1_f = _reference_f32(l0, w_in, w_res, w_out, b_out)
    assert out1.shape == (1, e_dim)
    assert bool(jnp.all(jnp.isfinite(out1)))
    # Kernel vs identically-quantized math: tight.
    assert jnp.allclose(out1, ref1_q, atol=2e-3, rtol=2e-3)
    # Kernel vs exact-f32 module semantics: relaxed for bf16 weights.
    assert jnp.allclose(out1, ref1_f, atol=2e-2, rtol=2e-2)

    # --- batched forward (weights stay VMEM-resident across the grid) ------
    outB = jax.block_until_ready(
        op_layer_forward_batched(x_batched, w_cat, w_out_q, b2d))
    refB_q = _reference_bf16(x_batched, w_cat, w_out_q, b2d)
    refB_f = _reference_f32(x_batched, w_in, w_res, w_out, b_out)
    assert outB.shape == (batch, e_dim)
    assert bool(jnp.all(jnp.isfinite(outB)))
    assert jnp.allclose(outB, refB_q, atol=2e-3, rtol=2e-3)
    assert jnp.allclose(outB, refB_f, atol=2e-2, rtol=2e-2)

    print("KERNEL_OK")
</pallas_src>

<mosaic_0001>
module attributes {stable_mosaic.version = 11 : i64} {
  func.func @_op_layer_kernel(%arg0: i32, %arg1: memref<8x256xbf16, #tpu.memory_space<vmem>>, %arg2: memref<256x256xbf16, #tpu.memory_space<vmem>>, %arg3: memref<128x128xbf16, #tpu.memory_space<vmem>>, %arg4: memref<1x128xf32, #tpu.memory_space<vmem>>, %arg5: memref<8x128xf32, #tpu.memory_space<vmem>>) attributes {dimension_semantics = [#tpu.dimension_semantics<parallel>], iteration_bounds = array<i64: 1>, scalar_prefetch = 0 : i64, scratch_operands = 0 : i64, tpu.core_type = #tpu.core_type<tc>, window_params = [{transform_indices = @transform_0, window_bounds = array<i64: 8, 256>}, {pipeline_mode = #tpu.pipeline_mode<synchronous>, transform_indices = @transform_1, window_bounds = array<i64: 256, 256>}, {pipeline_mode = #tpu.pipeline_mode<synchronous>, transform_indices = @transform_2, window_bounds = array<i64: 128, 128>}, {pipeline_mode = #tpu.pipeline_mode<synchronous>, transform_indices = @transform_3, window_bounds = array<i64: 1, 128>}, {transform_indices = @transform_4, window_bounds = array<i64: 8, 128>}]} {
    %c0 = arith.constant 0 : index
    %c0_0 = arith.constant 0 : index
    %0 = vector.load %arg1[%c0, %c0_0] : memref<8x256xbf16, #tpu.memory_space<vmem>>, vector<8x256xbf16>
    %c0_1 = arith.constant 0 : index
    %c0_2 = arith.constant 0 : index
    %1 = vector.load %arg2[%c0_1, %c0_2] : memref<256x256xbf16, #tpu.memory_space<vmem>>, vector<256x256xbf16>
    %cst = arith.constant dense<0.000000e+00> : vector<8x256xf32>
    %2 = tpu.matmul %0, %1, %cst {dimension_numbers = #tpu.dot_dimension_numbers<[1], [0], [0], [1], [0, 0, 1, 1], [], []>} : vector<8x256xbf16>, vector<256x256xbf16>, vector<8x256xf32> -> vector<8x256xf32>
    %3 = vector.extract_strided_slice %2 {offsets = [0, 0], sizes = [8, 128], strides = [1, 1]} : vector<8x256xf32> to vector<8x128xf32>
    %cst_3 = arith.constant 0.000000e+00 : f32
    %4 = vector.broadcast %cst_3 : f32 to vector<8x128xf32>
    %5 = arith.maximumf %3, %4 : vector<8x128xf32>
    %6 = vector.extract_strided_slice %2 {offsets = [0, 128], sizes = [8, 128], strides = [1, 1]} : vector<8x256xf32> to vector<8x128xf32>
    %7 = arith.truncf %5 : vector<8x128xf32> to vector<8x128xbf16>
    %c0_4 = arith.constant 0 : index
    %c0_5 = arith.constant 0 : index
    %8 = vector.load %arg3[%c0_4, %c0_5] : memref<128x128xbf16, #tpu.memory_space<vmem>>, vector<128x128xbf16>
    %cst_6 = arith.constant dense<0.000000e+00> : vector<8x128xf32>
    %9 = tpu.matmul %7, %8, %cst_6 {dimension_numbers = #tpu.dot_dimension_numbers<[1], [0], [0], [1], [0, 0, 1, 1], [], []>} : vector<8x128xbf16>, vector<128x128xbf16>, vector<8x128xf32> -> vector<8x128xf32>
    %10 = arith.addf %6, %9 : vector<8x128xf32>
    %c0_7 = arith.constant 0 : index
    %c0_8 = arith.constant 0 : index
    %11 = vector.load %arg4[%c0_7, %c0_8] : memref<1x128xf32, #tpu.memory_space<vmem>>, vector<1x128xf32>
    %12 = vector.broadcast %11 : vector<1x128xf32> to vector<8x128xf32>
    %13 = arith.addf %10, %12 : vector<8x128xf32>
    %14 = arith.mulf %13, %13 : vector<8x128xf32>
    %cst_9 = arith.constant dense<0.000000e+00> : vector<8xf32>
    %15 = vector.multi_reduction <add>, %14, %cst_9 [1] : vector<8x128xf32> to vector<8xf32>
    %16 = vector.shape_cast %15 : vector<8xf32> to vector<8x1xf32>
    %cst_10 = arith.constant 1.000000e-24 : f32
    %17 = vector.broadcast %cst_10 : f32 to vector<8x1xf32>
    %18 = arith.maximumf %16, %17 : vector<8x1xf32>
    %19 = math.rsqrt %18 : vector<8x1xf32>
    %20 = vector.broadcast %19 : vector<8x1xf32> to vector<8x128xf32>
    %21 = arith.mulf %13, %20 : vector<8x128xf32>
    %c0_11 = arith.constant 0 : index
    %c0_12 = arith.constant 0 : index
    %22 = vector.load %arg5[%c0_11, %c0_12] : memref<8x128xf32, #tpu.memory_space<vmem>>, vector<8x128xf32>
    tpu.vector_store %arg5[%c0_11, %c0_12], %21 {strides = array<i32>} : memref<8x128xf32, #tpu.memory_space<vmem>>, vector<8x128xf32>,
    return
  }
  func.func @transform_0(%arg0: i32) -> (i32, i32) {
    %c0_i32 = arith.constant 0 : i32
    %c0_i32_0 = arith.constant 0 : i32
    return %arg0, %c0_i32 : i32, i32
  }
  func.func @transform_1(%arg0: i32) -> (i32, i32) {
    %c0_i32 = arith.constant 0 : i32
    %c0_i32_0 = arith.constant 0 : i32
    %c0_i32_1 = arith.constant 0 : i32
    return %c0_i32, %c0_i32_0 : i32, i32
  }
  func.func @transform_2(%arg0: i32) -> (i32, i32) {
    %c0_i32 = arith.constant 0 : i32
    %c0_i32_0 = arith.constant 0 : i32
    %c0_i32_1 = arith.constant 0 : i32
    return %c0_i32, %c0_i32_0 : i32, i32
  }
  func.func @transform_3(%arg0: i32) -> (i32, i32) {
    %c0_i32 = arith.constant 0 : i32
    %c0_i32_0 = arith.constant 0 : i32
    %c0_i32_1 = arith.constant 0 : i32
    return %c0_i32, %c0_i32_0 : i32, i32
  }
  func.func @transform_4(%arg0: i32) -> (i32, i32) {
    %c0_i32 = arith.constant 0 : i32
    %c0_i32_0 = arith.constant 0 : i32
    return %arg0, %c0_i32 : i32, i32
  }
}

</mosaic_0001>

<llo_original>
// kernel: op_layer_forward_batched.1
$region0: #{op_layer_forward_batched.1}
  #allocation0 [shape = 'u32[]', space=smem, size = 0x4, offset = 0x4, fixed_abs, tag = 'smem constant byte address 0x4 - core index']
  #allocation1 [shape = 'u32[144,128]{1,0:T(1,128)}', space=vmem, size = 0x12000, scoped, tag = 'internal scratch']
  %s0 = inlined_call_operand.vmem [shape: bf16[8,256], index: 0, kind: input, shape index: {}]
  %s1 = inlined_call_operand.hbm [shape: bf16[256,256], index: 1, kind: input, shape index: {}]
  %s2 = inlined_call_operand.hbm [shape: bf16[128,128], index: 2, kind: input, shape index: {}]
  %s3 = inlined_call_operand.vmem [shape: f32[1,128], index: 3, kind: input, shape index: {}]
  %s4 = inlined_call_operand.vmem [shape: f32[8,128], index: 4, kind: output, shape index: {}]
  %s5 = sld [smem:[#allocation0]]
  $region34: #{op_layer_forward_batched.1} parent=0
    _
  %s7 = ssub.s32 1, %s5
  %s8 = scalar_select 0, %s7, %s5
  $region1: #{op_layer_forward_batched.1} parent=0
    #allocation2 [shape = 'u8[131072]{0}', space=vmem, size = 0x20000, scoped, tag = 'input window, operand 1, single buffered']
    #allocation3 [shape = 's32[1]{0}', space=sflag, size = 0x4, scoped, tag = 'scoped memory for op_layer_forward_batched.1']
    #allocation4 [shape = 'u8[32768]{0}', space=vmem, size = 0x8000, scoped, tag = 'input window, operand 2, single buffered']
    #allocation5 [shape = 's32[1]{0}', space=sflag, size = 0x4, scoped, tag = 'scoped memory for op_layer_forward_batched.1']
    %9 = vsyncpa [#allocation3], 0
    %10 = vsyncpa [#allocation5], 0
    // Predicated region
    $region2: #{op_layer_forward_batched.1} parent=1 // pred_check
      _
    $region3: #{op_layer_forward_batched.1} parent=1 // pred_check_branch
      %12 = sbr.rel (0) target = $region5
    $region4: #{op_layer_forward_batched.1} parent=1 // pred_region
      _
    $region5: #{op_layer_forward_batched.1} parent=1 // pred_fallthru
      _
    // Predicated region
    $region6: #{op_layer_forward_batched.1} parent=1 // pred_check
      _
    $region7: #{op_layer_forward_batched.1} parent=1 // pred_check_branch
      %14 = sbr.rel (0) target = $region9
    $region8: #{op_layer_forward_batched.1} parent=1 // pred_region
      %s16 = ssub.s32 4096, 4096
      %17 = vsyncadd [#allocation3], %s16
      %s18 = sshll.u32 [#allocation2], 4
      %s19 = int_to_ptr.vmem [resolvable:$true] %s18
      %24 = dma.hbm_to_vmem [thread:$0]  %s1, 4096, %s19, [#allocation3], 128, 128, 8
    $region9: #{op_layer_forward_batched.1} parent=1 // pred_fallthru
      _
    // Predicated region
    $region10: #{op_layer_forward_batched.1} parent=1 // pred_check
      _
    $region11: #{op_layer_forward_batched.1} parent=1 // pred_check_branch
      %26 = sbr.rel (0) target = $region13
    $region12: #{op_layer_forward_batched.1} parent=1 // pred_region
      %s28 = ssub.s32 1024, 1024
      %29 = vsyncadd [#allocation5], %s28
      %s30 = sshll.u32 [#allocation4], 4
      %s31 = int_to_ptr.vmem [resolvable:$true] %s30
      %36 = dma.hbm_to_vmem [thread:$0]  %s2, 1024, %s31, [#allocation5], 64, 64, 4
    $region13: #{op_layer_forward_batched.1} parent=1 // pred_fallthru
      _
    // Predicated region
    $region14: #{op_layer_forward_batched.1} parent=1 // pred_check
      _
    $region15: #{op_layer_forward_batched.1} parent=1 // pred_check_branch
      %38 = sbr.rel (0) target = $region17
    $region16: #{op_layer_forward_batched.1} parent=1 // pred_region
      _
    $region17: #{op_layer_forward_batched.1} parent=1 // pred_fallthru
      _
    // Predicated region
    $region18: #{op_layer_forward_batched.1} parent=1 // pred_check
      _
    $region19: #{op_layer_forward_batched.1} parent=1 // pred_check_branch
      %40 = sbr.rel (0) target = $region21
    $region20: #{op_layer_forward_batched.1} parent=1 // pred_region
      %41 = dma.done [#allocation3], 4096
    $region21: #{op_layer_forward_batched.1} parent=1 // pred_fallthru
      _
    // Predicated region
    $region22: #{op_layer_forward_batched.1} parent=1 // pred_check
      _
    $region23: #{op_layer_forward_batched.1} parent=1 // pred_check_branch
      %43 = sbr.rel (0) target = $region25
    $region24: #{op_layer_forward_batched.1} parent=1 // pred_region
      %44 = dma.done [#allocation5], 1024
    $region25: #{op_layer_forward_batched.1} parent=1 // pred_fallthru
      _
    %v46 = vld [vmem:[%s0] sm:$0xff]
    %v47 = vld [vmem:[#allocation2] sm:$0xff]
    %v48 = vld [vmem:[#allocation2 + $0x8] sm:$0xff]
    %v49 = vld [vmem:[#allocation2 + $0x10] sm:$0xff]
    %v50 = vld [vmem:[#allocation2 + $0x18] sm:$0xff]
    %v51 = vld [vmem:[#allocation2 + $0x20] sm:$0xff]
    %v52 = vld [vmem:[#allocation2 + $0x28] sm:$0xff]
    %v53 = vld [vmem:[#allocation2 + $0x30] sm:$0xff]
    %v54 = vld [vmem:[#allocation2 + $0x38] sm:$0xff]
    %v55 = vld [vmem:[#allocation2 + $0x40] sm:$0xff]
    %v56 = vld [vmem:[#allocation2 + $0x48] sm:$0xff]
    %v57 = vld [vmem:[#allocation2 + $0x50] sm:$0xff]
    %v58 = vld [vmem:[#allocation2 + $0x58] sm:$0xff]
    %v59 = vld [vmem:[#allocation2 + $0x60] sm:$0xff]
    %v60 = vld [vmem:[#allocation2 + $0x68] sm:$0xff]
    %v61 = vld [vmem:[#allocation2 + $0x70] sm:$0xff]
    %v62 = vld [vmem:[#allocation2 + $0x78] sm:$0xff]
    %v63 = vld [vmem:[#allocation2 + $0x80] sm:$0xff]
    %v64 = vld [vmem:[#allocation2 + $0x88] sm:$0xff]
    %v65 = vld [vmem:[#allocation2 + $0x90] sm:$0xff]
    %v66 = vld [vmem:[#allocation2 + $0x98] sm:$0xff]
    %v67 = vld [vmem:[#allocation2 + $0xa0] sm:$0xff]
    %v68 = vld [vmem:[#allocation2 + $0xa8] sm:$0xff]
    %v69 = vld [vmem:[#allocation2 + $0xb0] sm:$0xff]
    %v70 = vld [vmem:[#allocation2 + $0xb8] sm:$0xff]
    %v71 = vld [vmem:[#allocation2 + $0xc0] sm:$0xff]
    %v72 = vld [vmem:[#allocation2 + $0xc8] sm:$0xff]
    %v73 = vld [vmem:[#allocation2 + $0xd0] sm:$0xff]
    %v74 = vld [vmem:[#allocation2 + $0xd8] sm:$0xff]
    %v75 = vld [vmem:[#allocation2 + $0xe0] sm:$0xff]
    %v76 = vld [vmem:[#allocation2 + $0xe8] sm:$0xff]
    %v77 = vld [vmem:[#allocation2 + $0xf0] sm:$0xff]
    %v78 = vld [vmem:[#allocation2 + $0xf8] sm:$0xff]
    %v80 = vunpack.c.l.b16 %v46
    %v81 = vunpack.c.h.b16 %v46
    %v82 = vpack.c.b16 %v80, %v80
    %v83 = vpack.c.b16 %v81, %v81
    %v118 = vunpack.c.l.b16 %v47
    %v119 = vunpack.c.h.b16 %v47
    %v120 = vunpack.c.l.b16 %v48
    %v121 = vunpack.c.h.b16 %v48
    %v122 = vunpack.c.l.b16 %v49
    %v123 = vunpack.c.h.b16 %v49
    %v124 = vunpack.c.l.b16 %v50
    %v125 = vunpack.c.h.b16 %v50
    %v126 = vunpack.c.l.b16 %v51
    %v127 = vunpack.c.h.b16 %v51
    %v128 = vunpack.c.l.b16 %v52
    %v129 = vunpack.c.h.b16 %v52
    %v130 = vunpack.c.l.b16 %v53
    %v131 = vunpack.c.h.b16 %v53
    %v132 = vunpack.c.l.b16 %v54
    %v133 = vunpack.c.h.b16 %v54
    %v134 = vunpack.c.l.b16 %v55
    %v135 = vunpack.c.h.b16 %v55
    %v136 = vunpack.c.l.b16 %v56
    %v137 = vunpack.c.h.b16 %v56
    %v138 = vunpack.c.l.b16 %v57
    %v139 = vunpack.c.h.b16 %v57
    %v140 = vunpack.c.l.b16 %v58
    %v141 = vunpack.c.h.b16 %v58
    %v142 = vunpack.c.l.b16 %v59
    %v143 = vunpack.c.h.b16 %v59
    %v144 = vunpack.c.l.b16 %v60
    %v145 = vunpack.c.h.b16 %v60
    %v146 = vunpack.c.l.b16 %v61
    %v147 = vunpack.c.h.b16 %v61
    %v148 = vunpack.c.l.b16 %v62
    %v149 = vunpack.c.h.b16 %v62
    %v150 = vunpack.c.l.b16 %v63
    %v151 = vunpack.c.h.b16 %v63
    %v152 = vunpack.c.l.b16 %v64
    %v153 = vunpack.c.h.b16 %v64
    %v154 = vunpack.c.l.b16 %v65
    %v155 = vunpack.c.h.b16 %v65
    %v156 = vunpack.c.l.b16 %v66
    %v157 = vunpack.c.h.b16 %v66
    %v158 = vunpack.c.l.b16 %v67
    %v159 = vunpack.c.h.b16 %v67
    %v160 = vunpack.c.l.b16 %v68
    %v161 = vunpack.c.h.b16 %v68
    %v162 = vunpack.c.l.b16 %v69
    %v163 = vunpack.c.h.b16 %v69
    %v164 = vunpack.c.l.b16 %v70
    %v165 = vunpack.c.h.b16 %v70
    %v166 = vunpack.c.l.b16 %v71
    %v167 = vunpack.c.h.b16 %v71
    %v168 = vunpack.c.l.b16 %v72
    %v169 = vunpack.c.h.b16 %v72
    %v170 = vunpack.c.l.b16 %v73
    %v171 = vunpack.c.h.b16 %v73
    %v172 = vunpack.c.l.b16 %v74
    %v173 = vunpack.c.h.b16 %v74
    %v174 = vunpack.c.l.b16 %v75
    %v175 = vunpack.c.h.b16 %v75
    %v176 = vunpack.c.l.b16 %v76
    %v177 = vunpack.c.h.b16 %v76
    %v178 = vunpack.c.l.b16 %v77
    %v179 = vunpack.c.h.b16 %v77
    %v180 = vunpack.c.l.b16 %v78
    %v181 = vunpack.c.h.b16 %v78
    %v182 = vpack.c.b16 %v120, %v118
    %v183 = vpack.c.b16 %v121, %v119
    %v184 = vpack.c.b16 %v124, %v122
    %v185 = vpack.c.b16 %v125, %v123
    %v186 = vpack.c.b16 %v128, %v126
    %v187 = vpack.c.b16 %v129, %v127
    %v188 = vpack.c.b16 %v132, %v130
    %v189 = vpack.c.b16 %v133, %v131
    %v190 = vpack.c.b16 %v136, %v134
    %v191 = vpack.c.b16 %v137, %v135
    %v192 = vpack.c.b16 %v140, %v138
    %v193 = vpack.c.b16 %v141, %v139
    %v194 = vpack.c.b16 %v144, %v142
    %v195 = vpack.c.b16 %v145, %v143
    %v196 = vpack.c.b16 %v148, %v146
    %v197 = vpack.c.b16 %v149, %v147
    %v198 = vpack.c.b16 %v152, %v150
    %v199 = vpack.c.b16 %v153, %v151
    %v200 = vpack.c.b16 %v156, %v154
    %v201 = vpack.c.b16 %v157, %v155
    %v202 = vpack.c.b16 %v160, %v158
    %v203 = vpack.c.b16 %v161, %v159
    %v204 = vpack.c.b16 %v164, %v162
    %v205 = vpack.c.b16 %v165, %v163
    %v206 = vpack.c.b16 %v168, %v166
    %v207 = vpack.c.b16 %v169, %v167
    %v208 = vpack.c.b16 %v172, %v170
    %v209 = vpack.c.b16 %v173, %v171
    %v210 = vpack.c.b16 %v176, %v174
    %v211 = vpack.c.b16 %v177, %v175
    %v212 = vpack.c.b16 %v180, %v178
    %v213 = vpack.c.b16 %v181, %v179
    %246 = vmatprep.subr.bf16.mxu0 %v183
    %247 = vmatpush1.bf16.msra.mxu0 %v182
    %248 = vmatprep.subr.bf16.mxu0 %v185
    %249 = vmatpush1.bf16.msra.mxu0 %v184
    %250 = vmatprep.subr.bf16.mxu0 %v187
    %251 = vmatpush1.bf16.msra.mxu0 %v186
    %252 = vmatprep.subr.bf16.mxu0 %v189
    %253 = vmatpush1.bf16.msra.mxu0 %v188
    %254 = vmatprep.subr.bf16.mxu0 %v191
    %255 = vmatpush1.bf16.msra.mxu0 %v190
    %256 = vmatprep.subr.bf16.mxu0 %v193
    %257 = vmatpush1.bf16.msra.mxu0 %v192
    %258 = vmatprep.subr.bf16.mxu0 %v195
    %259 = vmatpush1.bf16.msra.mxu0 %v194
    %260 = vmatprep.subr.bf16.mxu0 %v197
    %261 = vmatpush1.bf16.msra.mxu0 %v196
    %262 = vmatprep.subr.bf16.mxu0 %v199
    %263 = vmatpush1.bf16.msra.mxu0 %v198
    %264 = vmatprep.subr.bf16.mxu0 %v201
    %265 = vmatpush1.bf16.msra.mxu0 %v200
    %266 = vmatprep.subr.bf16.mxu0 %v203
    %267 = vmatpush1.bf16.msra.mxu0 %v202
    %268 = vmatprep.subr.bf16.mxu0 %v205
    %269 = vmatpush1.bf16.msra.mxu0 %v204
    %270 = vmatprep.subr.bf16.mxu0 %v207
    %271 = vmatpush1.bf16.msra.mxu0 %v206
    %272 = vmatprep.subr.bf16.mxu0 %v209
    %273 = vmatpush1.bf16.msra.mxu0 %v208
    %274 = vmatprep.subr.bf16.mxu0 %v211
    %275 = vmatpush1.bf16.msra.mxu0 %v210
    %276 = vmatprep.subr.bf16.mxu0 %v213
    %277 = vmatpush1.bf16.msra.mxu0 %v212
    %278 = vmatprep.mubr.bf16.mxu0 %v83
    %279 = vmatmul.mubr.bf16.gmra.mrb[0].mxu0 %v82
    %v280 = vpop.f32.mrb[0].mxu0
    %v281 = vadd.f32 0.0, %v280
    %v282 = vpop.f32.mrb[0].mxu0
    %v283 = vadd.f32 0.0, %v282
    %v284 = vpop.f32.mrb[0].mxu0
    %v285 = vpop.f32.mrb[0].mxu0
    %286 = vdwg.mxu0
    %v287 = vmax.f32 %v281, 0.0
    %v288 = vpack.c.bf16 %v287, %v287
    %v289 = vld [vmem:[#allocation4] sm:$0xf]
    %v290 = vld [vmem:[#allocation4 + $0x4] sm:$0xf]
    %v291 = vld [vmem:[#allocation4 + $0x8] sm:$0xf]
    %v292 = vld [vmem:[#allocation4 + $0xc] sm:$0xf]
    %v293 = vld [vmem:[#allocation4 + $0x10] sm:$0xf]
    %v294 = vld [vmem:[#allocation4 + $0x14] sm:$0xf]
    %v295 = vld [vmem:[#allocation4 + $0x18] sm:$0xf]
    %v296 = vld [vmem:[#allocation4 + $0x1c] sm:$0xf]
    %v297 = vld [vmem:[#allocation4 + $0x20] sm:$0xf]
    %v298 = vld [vmem:[#allocation4 + $0x24] sm:$0xf]
    %v299 = vld [vmem:[#allocation4 + $0x28] sm:$0xf]
    %v300 = vld [vmem:[#allocation4 + $0x2c] sm:$0xf]
    %v301 = vld [vmem:[#allocation4 + $0x30] sm:$0xf]
    %v302 = vld [vmem:[#allocation4 + $0x34] sm:$0xf]
    %v303 = vld [vmem:[#allocation4 + $0x38] sm:$0xf]
    %v304 = vld [vmem:[#allocation4 + $0x3c] sm:$0xf]
    %v321 = vunpack.c.l.b16 %v289
    %v322 = vunpack.c.l.b16 %v290
    %v323 = vunpack.c.l.b16 %v291
    %v324 = vunpack.c.l.b16 %v292
    %v325 = vunpack.c.l.b16 %v293
    %v326 = vunpack.c.l.b16 %v294
    %v327 = vunpack.c.l.b16 %v295
    %v328 = vunpack.c.l.b16 %v296
    %v329 = vunpack.c.l.b16 %v297
    %v330 = vunpack.c.l.b16 %v298
    %v331 = vunpack.c.l.b16 %v299
    %v332 = vunpack.c.l.b16 %v300
    %v333 = vunpack.c.l.b16 %v301
    %v334 = vunpack.c.l.b16 %v302
    %v335 = vunpack.c.l.b16 %v303
    %v336 = vunpack.c.l.b16 %v304
    %v337 = vpack.c.b16 %v322, %v321
    %v338 = vpack.c.b16 %v324, %v323
    %v339 = vpack.c.b16 %v326, %v325
    %v340 = vpack.c.b16 %v328, %v327
    %v341 = vpack.c.b16 %v330, %v329
    %v342 = vpack.c.b16 %v332, %v331
    %v343 = vpack.c.b16 %v334, %v333
    %v344 = vpack.c.b16 %v336, %v335
    %353 = vmatprep.subr.bf16.mxu0 0
    %354 = vmatpush1.bf16.msra.mxu0 %v337
    %355 = vmatprep.subr.bf16.mxu0 0
    %356 = vmatpush1.bf16.msra.mxu0 %v338
    %357 = vmatprep.subr.bf16.mxu0 0
    %358 = vmatpush1.bf16.msra.mxu0 %v339
    %359 = vmatprep.subr.bf16.mxu0 0
    %360 = vmatpush1.bf16.msra.mxu0 %v340
    %361 = vmatprep.subr.bf16.mxu0 0
    %362 = vmatpush1.bf16.msra.mxu0 %v341
    %363 = vmatprep.subr.bf16.mxu0 0
    %364 = vmatpush1.bf16.msra.mxu0 %v342
    %365 = vmatprep.subr.bf16.mxu0 0
    %366 = vmatpush1.bf16.msra.mxu0 %v343
    %367 = vmatprep.subr.bf16.mxu0 0
    %368 = vmatpush1.bf16.msra.mxu0 %v344
    %369 = vmatprep.subr.bf16.mxu0 0
    %370 = vmatpush1.bf16.msra.mxu0 0
    %371 = vmatprep.subr.bf16.mxu0 0
    %372 = vmatpush1.bf16.msra.mxu0 0
    %373 = vmatprep.subr.bf16.mxu0 0
    %374 = vmatpush1.bf16.msra.mxu0 0
    %375 = vmatprep.subr.bf16.mxu0 0
    %376 = vmatpush1.bf16.msra.mxu0 0
    %377 = vmatprep.subr.bf16.mxu0 0
    %378 = vmatpush1.bf16.msra.mxu0 0
    %379 = vmatprep.subr.bf16.mxu0 0
    %380 = vmatpush1.bf16.msra.mxu0 0
    %381 = vmatprep.subr.bf16.mxu0 0
    %382 = vmatpush1.bf16.msra.mxu0 0
    %383 = vmatprep.subr.bf16.mxu0 0
    %384 = vmatpush1.bf16.msra.mxu0 0
    %385 = vmatprep.mubr.bf16.mxu0 0
    %386 = vmatmul.mubr.bf16.gmra.mrb[0].mxu0 %v288
    %v387 = vpop.f32.mrb[0].mxu0
    %v388 = vadd.f32 0.0, %v387
    %v389 = vpop.f32.mrb[0].mxu0
    %v390 = vpop.f32.mrb[0].mxu0
    %v391 = vpop.f32.mrb[0].mxu0
    %392 = vdwg.mxu0
    %v393 = vadd.f32 %v283, %v388
    %v394 = vld [vmem:[%s3] sm:$0x1]
    %v396 = vlaneseq
    %v397 = vshrl.u32 %v396, 7
    %v398 = vsub.s32 0, %v397
    %v399 = vrot.slane %v394, %v398
    %v401 = vadd.f32 %v393, %v399
    %v402 = vmul.f32 %v401, %v401
    %403 = vadd.xlane.f32.xlu0 %v402
    %v404 = vpop.xlane.xlu0 %403
    %v405 = vmax.f32 %v404, 1e-24
    %v406 = vrsqrt.pop %v405
    %v407 = vmul.f32 %v401, %v406
    %408 = vst [vmem:[%s4] sm:$0xff] %v407
    // Predicated region
    $region26: #{op_layer_forward_batched.1} parent=1 // pred_check
      _
    $region27: #{op_layer_forward_batched.1} parent=1 // pred_check_branch
      %410 = sbr.rel (0) target = $region29
    $region28: #{op_layer_forward_batched.1} parent=1 // pred_region
      _
    $region29: #{op_layer_forward_batched.1} parent=1 // pred_fallthru
      _
    // Predicated region
    $region30: #{op_layer_forward_batched.1} parent=1 // pred_check
      _
    $region31: #{op_layer_forward_batched.1} parent=1 // pred_check_branch
      %412 = sbr.rel (0) target = $region33
    $region32: #{op_layer_forward_batched.1} parent=1 // pred_region
      _
    $region33: #{op_layer_forward_batched.1} parent=1 // pred_fallthru
      _
    %413 = vsyncpa [#allocation3], 1
    %414 = vsyncpa [#allocation5], 1

</llo_original>
